<compile_context>
chip_gen: v5e
topology: v5e:2x2
jax: 0.10.0
libtpu: 0.0.40
codegen_flags: <defaults>
</compile_context>

<pallas_src>
import jax
import jax.numpy as jnp
from jax.experimental import pallas as pl
from jax.experimental.pallas import tpu as pltpu

_EPS = 1e-6
_LANES = 128


def _make_kernel(tr, rows, nb_per, may_overhang):
    """Kernel factory closing over static tiling parameters."""

    def kernel(pred_ref, true_ref, out_sq_ref, out_abs_ref, acc_sq, acc_abs):
        c = pl.program_id(0)  # core / partial-sum slot
        i = pl.program_id(1)  # row-block index within this slot

        @pl.when(i == 0)
        def _init():
            acc_sq[...] = jnp.zeros_like(acc_sq)
            acc_abs[...] = jnp.zeros_like(acc_abs)

        # (p + 1e-6) - (t + 1e-6) == p - t: the offsets cancel, dropping them
        # only perturbs results at float-rounding level.
        d = pred_ref[...].astype(jnp.float32) - true_ref[...].astype(jnp.float32)

        def _accumulate(dd):
            a = jnp.abs(dd)
            # Fold (tr, 128) -> (8, 128) with cross-vreg VPU adds; the reshape is
            # aligned to the (8, 128) tiling so it is layout-free.
            acc_abs[...] += jnp.sum(a.reshape(-1, 8, _LANES), axis=0)
            acc_sq[...] += jnp.sum((a * a).reshape(-1, 8, _LANES), axis=0)

        if may_overhang:
            # Global row offset of this block (unclamped, even for the duplicate
            # block that a clamped index_map may re-read).
            row_start = (c * nb_per + i) * tr
            in_bounds = row_start + tr <= rows

            @pl.when(in_bounds)
            def _full():
                _accumulate(d)

            @pl.when(jnp.logical_not(in_bounds))
            def _edge():
                # Overhanging / duplicated block: zero out rows past the array.
                rid = jax.lax.broadcasted_iota(jnp.int32, (tr, _LANES), 0)
                _accumulate(jnp.where(rid < (rows - row_start), d, 0.0))
        else:
            _accumulate(d)

        @pl.when(i == nb_per - 1)
        def _finalize():
            out_sq_ref[0] = acc_sq[...]
            out_abs_ref[0] = acc_abs[...]

    return kernel


def l1_and_l2(predictions, true, H_T_1=None, *, tile_rows=2048,
              min_pallas_elements=262144):
    """sqrt(mean((p-t)^2)) + mean(|p-t|), matching the PyTorch module.

    H_T_1 is accepted for interface parity but never used (the module ignores
    it), so it is never DMA'd.
    """
    assert predictions.shape == true.shape
    n_elem = predictions.size

    p_flat = predictions.reshape(-1)
    t_flat = true.reshape(-1)

    rows = n_elem // _LANES          # full 128-lane rows
    n_main = rows * _LANES
    rem = n_elem - n_main            # <128-element flat tail

    # Small-input fallback: a single fused XLA reduction beats kernel launch
    # plus pipeline-setup overhead for tiny tensors.
    if n_elem < min_pallas_elements or rows == 0:
        d = (p_flat.astype(jnp.float32) + _EPS) - (t_flat.astype(jnp.float32) + _EPS)
        return jnp.sqrt(jnp.mean(d * d)) + jnp.mean(jnp.abs(d))

    # Tail (< 128 elements) reduced directly in the wrapper (negligible traffic).
    if rem:
        p_tail = p_flat[n_main:].astype(jnp.float32) + _EPS
        t_tail = t_flat[n_main:].astype(jnp.float32) + _EPS
        d_tail = p_tail - t_tail
        tail_sq = jnp.sum(d_tail * d_tail)
        tail_abs = jnp.sum(jnp.abs(d_tail))
        p_main = p_flat[:n_main]
        t_main = t_flat[:n_main]
    else:
        tail_sq = jnp.float32(0.0)
        tail_abs = jnp.float32(0.0)
        p_main = p_flat
        t_main = t_flat

    # Lane-dense (rows, 128) slabs in native dtype (cast happens in-kernel).
    p2 = p_main.reshape(rows, _LANES)
    t2 = t_main.reshape(rows, _LANES)

    # Tile rows: multiple of 8, capped by the (rounded-up) row count.
    tr = max(8, (int(tile_rows) // 8) * 8)
    tr = min(tr, ((rows + 7) // 8) * 8)

    nb_total = pl.cdiv(rows, tr)         # real row blocks
    nb_per = pl.cdiv(nb_total, 2)        # row blocks per core slot
    # Overhang exists iff the 2*nb_per blocks cover more rows than exist.
    may_overhang = not (rows % tr == 0 and nb_total == 2 * nb_per)

    kernel = _make_kernel(tr, rows, nb_per, may_overhang)

    # Clamp the block index so the (at most one) surplus block re-reads a valid
    # block instead of addressing past the array; it is fully masked in-kernel.
    def in_map(c, i):
        return (jnp.minimum(c * nb_per + i, nb_total - 1), 0)

    in_spec = pl.BlockSpec((tr, _LANES), in_map)
    out_spec = pl.BlockSpec((1, 8, _LANES), lambda c, i: (c, 0, 0))

    out_sq, out_abs = pl.pallas_call(
        kernel,
        out_shape=(
            jax.ShapeDtypeStruct((2, 8, _LANES), jnp.float32),
            jax.ShapeDtypeStruct((2, 8, _LANES), jnp.float32),
        ),
        grid_spec=pltpu.PrefetchScalarGridSpec(
            num_scalar_prefetch=0,
            grid=(2, nb_per),
            in_specs=[in_spec, in_spec],
            out_specs=[out_spec, out_spec],
            scratch_shapes=[
                pltpu.VMEM((8, _LANES), jnp.float32),  # sum of d^2
                pltpu.VMEM((8, _LANES), jnp.float32),  # sum of |d|
            ],
        ),
        compiler_params=pltpu.CompilerParams(
            dimension_semantics=("parallel", "arbitrary"),
        ),
    )(p2, t2)

    sum_sq = jnp.sum(out_sq) + tail_sq
    sum_abs = jnp.sum(out_abs) + tail_abs
    n = jnp.float32(n_elem)
    return jnp.sqrt(sum_sq / n) + sum_abs / n


def _reference(predictions, true):
    d = (predictions.astype(jnp.float32) + _EPS) - (true.astype(jnp.float32) + _EPS)
    return jnp.sqrt(jnp.mean(d * d)) + jnp.mean(jnp.abs(d))


if __name__ == "__main__":
    key = jax.random.PRNGKey(0)
    k1, k2, k3 = jax.random.split(key, 3)

    # Small NCHW shape: batch=2, channels=4, spatial=16x16 -> 2048 elements.
    shape = (2, 4, 16, 16)
    predictions = jax.random.uniform(k1, shape, jnp.float32, minval=0.0, maxval=5.0)
    true = jax.random.uniform(k2, shape, jnp.float32, minval=0.0, maxval=5.0)
    H_T_1 = jax.random.uniform(k3, shape, jnp.float32, minval=0.5, maxval=1.5)
    ref = _reference(predictions, true)

    # 1) Default path: small-input jnp fallback.
    out_fb = jax.block_until_ready(l1_and_l2(predictions, true, H_T_1))
    assert jnp.allclose(out_fb, ref, rtol=1e-4, atol=1e-5), (out_fb, ref)

    # 2) Force the Pallas kernel on the same shape (single block + masked
    #    duplicate block on the second core slot).
    out_k = jax.block_until_ready(
        l1_and_l2(predictions, true, H_T_1, min_pallas_elements=0))
    assert jnp.allclose(out_k, ref, rtol=1e-4, atol=1e-5), (out_k, ref)

    # 3) Ragged shape (not a multiple of 128): exercises the overhang mask and
    #    the <128-element tail path.
    shape_r = (2, 3, 17, 19)  # 1938 elements -> 15 rows + 18-element tail
    p_r = jax.random.uniform(k1, shape_r, jnp.float32, minval=0.0, maxval=5.0)
    t_r = jax.random.uniform(k2, shape_r, jnp.float32, minval=0.0, maxval=5.0)
    out_r = jax.block_until_ready(l1_and_l2(p_r, t_r, None, min_pallas_elements=0))
    ref_r = _reference(p_r, t_r)
    assert jnp.allclose(out_r, ref_r, rtol=1e-4, atol=1e-5), (out_r, ref_r)

    # 4) Multi-block grid: 65536 elements, tile_rows=128 -> grid (2, 2).
    shape_b = (2, 4, 64, 128)
    p_b = jax.random.uniform(k1, shape_b, jnp.float32, minval=0.0, maxval=5.0)
    t_b = jax.random.uniform(k2, shape_b, jnp.float32, minval=0.0, maxval=5.0)
    out_b = jax.block_until_ready(
        l1_and_l2(p_b, t_b, None, tile_rows=128, min_pallas_elements=0))
    ref_b = _reference(p_b, t_b)
    assert jnp.allclose(out_b, ref_b, rtol=1e-4, atol=1e-5), (out_b, ref_b)

    print("KERNEL_OK")
</pallas_src>

<mosaic_0001>
module attributes {stable_mosaic.version = 11 : i64} {
  func.func @kernel(%arg0: i32, %arg1: i32, %arg2: memref<16x128xf32, #tpu.memory_space<vmem>>, %arg3: memref<16x128xf32, #tpu.memory_space<vmem>>, %arg4: memref<1x8x128xf32, #tpu.memory_space<vmem>>, %arg5: memref<1x8x128xf32, #tpu.memory_space<vmem>>, %arg6: memref<8x128xf32, #tpu.memory_space<vmem>>, %arg7: memref<8x128xf32, #tpu.memory_space<vmem>>) attributes {dimension_semantics = [#tpu.dimension_semantics<parallel>, #tpu.dimension_semantics<arbitrary>], iteration_bounds = array<i64: 2, 1>, scalar_prefetch = 0 : i64, scratch_operands = 2 : i64, tpu.core_type = #tpu.core_type<tc>, window_params = [{transform_indices = @transform_0, window_bounds = array<i64: 16, 128>}, {transform_indices = @transform_1, window_bounds = array<i64: 16, 128>}, {transform_indices = @transform_2, window_bounds = array<i64: 1, 8, 128>}, {transform_indices = @transform_3, window_bounds = array<i64: 1, 8, 128>}]} {
    %c0_i32 = arith.constant 0 : i32
    %0 = arith.cmpi eq, %arg1, %c0_i32 : i32
    %1 = arith.extui %0 : i1 to i32
    %c0_i32_0 = arith.constant 0 : i32
    %2 = arith.cmpi ne, %1, %c0_i32_0 : i32
    scf.if %2 {
      %cst = arith.constant 0.000000e+00 : f32
      %19 = vector.broadcast %cst : f32 to vector<8x128xf32>
      %c0_10 = arith.constant 0 : index
      %c0_11 = arith.constant 0 : index
      %20 = vector.load %arg6[%c0_10, %c0_11] : memref<8x128xf32, #tpu.memory_space<vmem>>, vector<8x128xf32>
      tpu.vector_store %arg6[%c0_10, %c0_11], %19 {strides = array<i32>} : memref<8x128xf32, #tpu.memory_space<vmem>>, vector<8x128xf32>,
      %cst_12 = arith.constant 0.000000e+00 : f32
      %21 = vector.broadcast %cst_12 : f32 to vector<8x128xf32>
      %c0_13 = arith.constant 0 : index
      %c0_14 = arith.constant 0 : index
      %22 = vector.load %arg7[%c0_13, %c0_14] : memref<8x128xf32, #tpu.memory_space<vmem>>, vector<8x128xf32>
      tpu.vector_store %arg7[%c0_13, %c0_14], %21 {strides = array<i32>} : memref<8x128xf32, #tpu.memory_space<vmem>>, vector<8x128xf32>,
    } else {
    }
    %c0 = arith.constant 0 : index
    %c0_1 = arith.constant 0 : index
    %3 = vector.load %arg2[%c0, %c0_1] : memref<16x128xf32, #tpu.memory_space<vmem>>, vector<16x128xf32>
    %c0_2 = arith.constant 0 : index
    %c0_3 = arith.constant 0 : index
    %4 = vector.load %arg3[%c0_2, %c0_3] : memref<16x128xf32, #tpu.memory_space<vmem>>, vector<16x128xf32>
    %5 = arith.subf %3, %4 : vector<16x128xf32>
    %c1_i32 = arith.constant 1 : i32
    %6 = arith.muli %arg0, %c1_i32 : i32
    %7 = arith.addi %6, %arg1 : i32
    %c16_i32 = arith.constant 16 : i32
    %8 = arith.muli %7, %c16_i32 : i32
    %c16_i32_4 = arith.constant 16 : i32
    %9 = arith.addi %8, %c16_i32_4 : i32
    %c16_i32_5 = arith.constant 16 : i32
    %10 = arith.cmpi sle, %9, %c16_i32_5 : i32
    %11 = arith.extui %10 : i1 to i32
    %c0_i32_6 = arith.constant 0 : i32
    %12 = arith.cmpi ne, %11, %c0_i32_6 : i32
    scf.if %12 {
      %19 = math.absf %5 : vector<16x128xf32>
      %c0_10 = arith.constant 0 : index
      %c0_11 = arith.constant 0 : index
      %20 = vector.load %arg7[%c0_10, %c0_11] : memref<8x128xf32, #tpu.memory_space<vmem>>, vector<8x128xf32>
      %21 = vector.shape_cast %19 : vector<16x128xf32> to vector<2x8x128xf32>
      %cst = arith.constant dense<0.000000e+00> : vector<8x128xf32>
      %22 = vector.multi_reduction <add>, %21, %cst [0] : vector<2x8x128xf32> to vector<8x128xf32>
      %23 = arith.addf %20, %22 : vector<8x128xf32>
      %c0_12 = arith.constant 0 : index
      %c0_13 = arith.constant 0 : index
      %24 = vector.load %arg7[%c0_12, %c0_13] : memref<8x128xf32, #tpu.memory_space<vmem>>, vector<8x128xf32>
      tpu.vector_store %arg7[%c0_12, %c0_13], %23 {strides = array<i32>} : memref<8x128xf32, #tpu.memory_space<vmem>>, vector<8x128xf32>,
      %c0_14 = arith.constant 0 : index
      %c0_15 = arith.constant 0 : index
      %25 = vector.load %arg6[%c0_14, %c0_15] : memref<8x128xf32, #tpu.memory_space<vmem>>, vector<8x128xf32>
      %26 = arith.mulf %19, %19 : vector<16x128xf32>
      %27 = vector.shape_cast %26 : vector<16x128xf32> to vector<2x8x128xf32>
      %cst_16 = arith.constant dense<0.000000e+00> : vector<8x128xf32>
      %28 = vector.multi_reduction <add>, %27, %cst_16 [0] : vector<2x8x128xf32> to vector<8x128xf32>
      %29 = arith.addf %25, %28 : vector<8x128xf32>
      %c0_17 = arith.constant 0 : index
      %c0_18 = arith.constant 0 : index
      %30 = vector.load %arg6[%c0_17, %c0_18] : memref<8x128xf32, #tpu.memory_space<vmem>>, vector<8x128xf32>
      tpu.vector_store %arg6[%c0_17, %c0_18], %29 {strides = array<i32>} : memref<8x128xf32, #tpu.memory_space<vmem>>, vector<8x128xf32>,
    } else {
    }
    %true = arith.constant true
    %13 = arith.xori %10, %true : i1
    %14 = arith.extui %13 : i1 to i32
    %c0_i32_7 = arith.constant 0 : i32
    %15 = arith.cmpi ne, %14, %c0_i32_7 : i32
    scf.if %15 {
      %19 = tpu.iota {dimensions = array<i32: 0>} : vector<16x128xi32>
      %c16_i32_10 = arith.constant 16 : i32
      %20 = arith.subi %c16_i32_10, %8 : i32
      %21 = vector.broadcast %20 : i32 to vector<16x128xi32>
      %22 = arith.cmpi slt, %19, %21 : vector<16x128xi32>
      %cst = arith.constant 0.000000e+00 : f32
      %23 = vector.broadcast %cst : f32 to vector<16x128xf32>
      %24 = arith.select %22, %5, %23 : vector<16x128xi1>, vector<16x128xf32>
      %25 = math.absf %24 : vector<16x128xf32>
      %c0_11 = arith.constant 0 : index
      %c0_12 = arith.constant 0 : index
      %26 = vector.load %arg7[%c0_11, %c0_12] : memref<8x128xf32, #tpu.memory_space<vmem>>, vector<8x128xf32>
      %27 = vector.shape_cast %25 : vector<16x128xf32> to vector<2x8x128xf32>
      %cst_13 = arith.constant dense<0.000000e+00> : vector<8x128xf32>
      %28 = vector.multi_reduction <add>, %27, %cst_13 [0] : vector<2x8x128xf32> to vector<8x128xf32>
      %29 = arith.addf %26, %28 : vector<8x128xf32>
      %c0_14 = arith.constant 0 : index
      %c0_15 = arith.constant 0 : index
      %30 = vector.load %arg7[%c0_14, %c0_15] : memref<8x128xf32, #tpu.memory_space<vmem>>, vector<8x128xf32>
      tpu.vector_store %arg7[%c0_14, %c0_15], %29 {strides = array<i32>} : memref<8x128xf32, #tpu.memory_space<vmem>>, vector<8x128xf32>,
      %c0_16 = arith.constant 0 : index
      %c0_17 = arith.constant 0 : index
      %31 = vector.load %arg6[%c0_16, %c0_17] : memref<8x128xf32, #tpu.memory_space<vmem>>, vector<8x128xf32>
      %32 = arith.mulf %25, %25 : vector<16x128xf32>
      %33 = vector.shape_cast %32 : vector<16x128xf32> to vector<2x8x128xf32>
      %cst_18 = arith.constant dense<0.000000e+00> : vector<8x128xf32>
      %34 = vector.multi_reduction <add>, %33, %cst_18 [0] : vector<2x8x128xf32> to vector<8x128xf32>
      %35 = arith.addf %31, %34 : vector<8x128xf32>
      %c0_19 = arith.constant 0 : index
      %c0_20 = arith.constant 0 : index
      %36 = vector.load %arg6[%c0_19, %c0_20] : memref<8x128xf32, #tpu.memory_space<vmem>>, vector<8x128xf32>
      tpu.vector_store %arg6[%c0_19, %c0_20], %35 {strides = array<i32>} : memref<8x128xf32, #tpu.memory_space<vmem>>, vector<8x128xf32>,
    } else {
    }
    %c0_i32_8 = arith.constant 0 : i32
    %16 = arith.cmpi eq, %arg1, %c0_i32_8 : i32
    %17 = arith.extui %16 : i1 to i32
    %c0_i32_9 = arith.constant 0 : i32
    %18 = arith.cmpi ne, %17, %c0_i32_9 : i32
    scf.if %18 {
      %c0_10 = arith.constant 0 : index
      %c0_11 = arith.constant 0 : index
      %19 = vector.load %arg6[%c0_10, %c0_11] : memref<8x128xf32, #tpu.memory_space<vmem>>, vector<8x128xf32>
      %c0_12 = arith.constant 0 : index
      %c0_13 = arith.constant 0 : index
      %c0_14 = arith.constant 0 : index
      %20 = vector.load %arg4[%c0_12, %c0_13, %c0_14] : memref<1x8x128xf32, #tpu.memory_space<vmem>>, vector<1x8x128xf32>
      %21 = vector.shape_cast %20 : vector<1x8x128xf32> to vector<8x128xf32>
      %22 = vector.shape_cast %19 : vector<8x128xf32> to vector<1x8x128xf32>
      tpu.vector_store %arg4[%c0_12, %c0_13, %c0_14], %22 {strides = array<i32>} : memref<1x8x128xf32, #tpu.memory_space<vmem>>, vector<1x8x128xf32>,
      %c0_15 = arith.constant 0 : index
      %c0_16 = arith.constant 0 : index
      %23 = vector.load %arg7[%c0_15, %c0_16] : memref<8x128xf32, #tpu.memory_space<vmem>>, vector<8x128xf32>
      %c0_17 = arith.constant 0 : index
      %c0_18 = arith.constant 0 : index
      %c0_19 = arith.constant 0 : index
      %24 = vector.load %arg5[%c0_17, %c0_18, %c0_19] : memref<1x8x128xf32, #tpu.memory_space<vmem>>, vector<1x8x128xf32>
      %25 = vector.shape_cast %24 : vector<1x8x128xf32> to vector<8x128xf32>
      %26 = vector.shape_cast %23 : vector<8x128xf32> to vector<1x8x128xf32>
      tpu.vector_store %arg5[%c0_17, %c0_18, %c0_19], %26 {strides = array<i32>} : memref<1x8x128xf32, #tpu.memory_space<vmem>>, vector<1x8x128xf32>,
    } else {
    }
    return
  }
  func.func @transform_0(%arg0: i32, %arg1: i32) -> (i32, i32) {
    %c1_i32 = arith.constant 1 : i32
    %0 = arith.muli %arg0, %c1_i32 : i32
    %1 = arith.addi %0, %arg1 : i32
    %c0_i32 = arith.constant 0 : i32
    %2 = arith.minsi %1, %c0_i32 : i32
    %c0_i32_0 = arith.constant 0 : i32
    %c0_i32_1 = arith.constant 0 : i32
    return %2, %c0_i32_0 : i32, i32
  }
  func.func @transform_1(%arg0: i32, %arg1: i32) -> (i32, i32) {
    %c1_i32 = arith.constant 1 : i32
    %0 = arith.muli %arg0, %c1_i32 : i32
    %1 = arith.addi %0, %arg1 : i32
    %c0_i32 = arith.constant 0 : i32
    %2 = arith.minsi %1, %c0_i32 : i32
    %c0_i32_0 = arith.constant 0 : i32
    %c0_i32_1 = arith.constant 0 : i32
    return %2, %c0_i32_0 : i32, i32
  }
  func.func @transform_2(%arg0: i32, %arg1: i32) -> (i32, i32, i32) {
    %c0_i32 = arith.constant 0 : i32
    %c0_i32_0 = arith.constant 0 : i32
    %c0_i32_1 = arith.constant 0 : i32
    return %arg0, %c0_i32, %c0_i32_0 : i32, i32, i32
  }
  func.func @transform_3(%arg0: i32, %arg1: i32) -> (i32, i32, i32) {
    %c0_i32 = arith.constant 0 : i32
    %c0_i32_0 = arith.constant 0 : i32
    %c0_i32_1 = arith.constant 0 : i32
    return %arg0, %c0_i32, %c0_i32_0 : i32, i32, i32
  }
}

</mosaic_0001>

<llo_original>
// kernel: tpu_custom_call.1
$region0: #{tpu_custom_call.1}
  #allocation0 [shape = 'u32[]', space=smem, size = 0x4, offset = 0x4, fixed_abs, tag = 'smem constant byte address 0x4 - core index']
  #allocation1 [shape = 'u32[72,128]{1,0:T(1,128)}', space=vmem, size = 0x9000, scoped, tag = 'internal scratch']
  #allocation2 [shape = 'f32[8,128]{1,0:T(8,128)}', space=vmem, size = 0x1000, scoped, tag = 'scratch operand']
  #allocation3 [shape = 'f32[8,128]{1,0:T(8,128)}', space=vmem, size = 0x1000, scoped, tag = 'scratch operand']
  %s0 = inlined_call_operand.hbm [shape: f32[16,128], index: 0, kind: input, shape index: {}]
  %s1 = inlined_call_operand.hbm [shape: f32[16,128], index: 1, kind: input, shape index: {}]
  %s2 = inlined_call_operand.hbm [shape: f32[2,8,128], index: 2, kind: output, shape index: {0}]
  %s3 = inlined_call_operand.hbm [shape: f32[2,8,128], index: 3, kind: output, shape index: {1}]
  %4 = xla_tuple %s2, %s3
  %s5 = sld [smem:[#allocation0]]
  $region73: #{tpu_custom_call.1} parent=0
    _
  %s7 = ssub.s32 1, %s5
  %s8 = scalar_select 0, %s7, %s5
  $region1: #{tpu_custom_call.1} parent=0
    #allocation4 [shape = 'u8[16384]{0}', space=vmem, size = 0x4000, scoped, tag = 'input window, operand 0']
    #allocation5 [shape = 's32[2]{0}', space=sflag, size = 0x8, scoped, tag = 'scoped memory for tpu_custom_call.1']
    #allocation6 [shape = 's32[2]{0}', space=sflag, size = 0x8, scoped, tag = 'scoped memory for tpu_custom_call.1']
    #allocation7 [shape = 'u8[16384]{0}', space=vmem, size = 0x4000, scoped, tag = 'input window, operand 1']
    #allocation8 [shape = 's32[2]{0}', space=sflag, size = 0x8, scoped, tag = 'scoped memory for tpu_custom_call.1']
    #allocation9 [shape = 'u8[8192]{0}', space=vmem, size = 0x2000, scoped, tag = 'output window, operand 0']
    #allocation10 [shape = 'u8[8192]{0}', space=vmem, size = 0x2000, scoped, tag = 'output window, operand 1']
    #allocation11 [shape = 's32[2]{0}', space=sflag, size = 0x8, scoped, tag = 'scoped memory for tpu_custom_call.1']
    %9 = vsyncpa [#allocation5], 0
    %s10 = scalar_lea.sflag [#allocation5], 1
    %11 = vsyncpa %s10, 0
    %12 = vsyncpa [#allocation8], 0
    %s13 = scalar_lea.sflag [#allocation8], 1
    %14 = vsyncpa %s13, 0
    %15 = vsyncpa [#allocation6], 0
    %s16 = scalar_lea.sflag [#allocation6], 1
    %17 = vsyncpa %s16, 0
    %18 = vsyncpa [#allocation11], 0
    %s19 = scalar_lea.sflag [#allocation11], 1
    %20 = vsyncpa %s19, 0
    loop: start=0, step=1, limit=4
    $region2: #{tpu_custom_call.1} parent=1 // loop_pre_header
      _
    $region3: #{tpu_custom_call.1} parent=1 // loop_header
      %s22 = sphi 0, %s26
      %p23 = scmp.ge.s32.totalorder %s22, 4
      %s29 = sphi 0, %s41
      %s30 = sphi 0, %s37
      %s31 = sphi 0, %s29
      %s32 = sphi 0, %s30
      %s33 = sphi 0, %s31
      %s34 = sphi 0, %s32
      %s50 = sphi 0, %s52
      %s53 = sphi 0, %s50
      %s54 = sphi 0, %s53
      %s70 = sphi 0, %s54
      %s82 = sphi 0, %s84
      %s85 = sphi 0, %s82
      %s86 = sphi 0, %s85
      %s102 = sphi 0, %s86
      %s108 = sphi 0, %s110
      %s111 = sphi 0, %s108
      %s112 = sphi 0, %s111
      %s128 = sphi 0, %s112
      %s134 = sphi 0, %s136
      %s137 = sphi 0, %s134
      %s138 = sphi 0, %s137
      %s154 = sphi 0, %s138
    $region4: #{tpu_custom_call.1} parent=1 // loop_header_branch
      %25 = sbr.rel (%p23) target = $region8
    $region5: #{tpu_custom_call.1} parent=1 // loop_body
      %s27 = ssub.s32 %s22, 1
      %s28 = ssub.s32 %s22, 2
      %s35 = sadd.s32 1, %s30
      %p36 = scmp.ge.s32.totalorder %s35, 1
      %s37 = scalar_select %p36, 0, %s35
      %s38 = sadd.s32 1, %s29
      %s39 = scalar_select %p36, %s38, %s29
      %p40 = scmp.ge.s32.totalorder %s39, 2
      %s41 = scalar_select %p40, 0, %s39
      %s42 = sadd.s32 %s29, %s30
      %p43 = scmp.lt.s32.totalorder %s42, 0
      %s44 = scalar_select %p43, %s42, 0
      %s45 = sadd.s32 %s41, %s37
      %p46 = scmp.lt.s32.totalorder %s45, 0
      %s47 = scalar_select %p46, %s45, 0
      %s48 = ssub.s32 %s44, %s47
      %p49 = scmp.eq.s32.totalorder %s48, 0
      %s51 = sadd.s32 %s50, 1
      %s52 = scalar_select %p49, %s50, %s51
      %p55 = pneg %p49
      %p56 = scmp.eq.s32.totalorder %s22, 1
      %p57 = por %p55, %p56
      %p58 = scmp.ne.s32.totalorder %s50, %s53
      %p59 = scmp.eq.s32.totalorder %s22, 0
      %p60 = por %p58, %p59
      %p61 = scmp.ne.s32.totalorder %s50, %s53
      %p62 = scmp.eq.s32.totalorder %s27, 1
      %p63 = por %p61, %p62
      %p64 = scmp.ne.s32.totalorder %s53, %s54
      %p65 = scmp.eq.s32.totalorder %s27, 0
      %p66 = por %p64, %p65
      %p67 = scmp.ne.s32.totalorder %s53, %s54
      %p68 = scmp.eq.s32.totalorder %s28, 1
      %p69 = por %p67, %p68
      %p71 = scmp.ne.s32.totalorder %s54, %s70
      %p72 = scmp.eq.s32.totalorder %s28, 0
      %p73 = por %p71, %p72
      %s74 = sadd.s32 %s29, %s30
      %p75 = scmp.lt.s32.totalorder %s74, 0
      %s76 = scalar_select %p75, %s74, 0
      %s77 = sadd.s32 %s41, %s37
      %p78 = scmp.lt.s32.totalorder %s77, 0
      %s79 = scalar_select %p78, %s77, 0
      %s80 = ssub.s32 %s76, %s79
      %p81 = scmp.eq.s32.totalorder %s80, 0
      %s83 = sadd.s32 %s82, 1
      %s84 = scalar_select %p81, %s82, %s83
      %p87 = pneg %p81
      %p88 = scmp.eq.s32.totalorder %s22, 1
      %p89 = por %p87, %p88
      %p90 = scmp.ne.s32.totalorder %s82, %s85
      %p91 = scmp.eq.s32.totalorder %s22, 0
      %p92 = por %p90, %p91
      %p93 = scmp.ne.s32.totalorder %s82, %s85
      %p94 = scmp.eq.s32.totalorder %s27, 1
      %p95 = por %p93, %p94
      %p96 = scmp.ne.s32.totalorder %s85, %s86
      %p97 = scmp.eq.s32.totalorder %s27, 0
      %p98 = por %p96, %p97
      %p99 = scmp.ne.s32.totalorder %s85, %s86
      %p100 = scmp.eq.s32.totalorder %s28, 1
      %p101 = por %p99, %p100
      %p103 = scmp.ne.s32.totalorder %s86, %s102
      %p104 = scmp.eq.s32.totalorder %s28, 0
      %p105 = por %p103, %p104
      %s106 = ssub.s32 %s29, %s41
      %p107 = scmp.eq.s32.totalorder %s106, 0
      %s109 = sadd.s32 %s108, 1
      %s110 = scalar_select %p107, %s108, %s109
      %p113 = pneg %p107
      %p114 = scmp.eq.s32.totalorder %s22, 1
      %p115 = por %p113, %p114
      %p116 = scmp.ne.s32.totalorder %s108, %s111
      %p117 = scmp.eq.s32.totalorder %s22, 0
      %p118 = por %p116, %p117
      %p119 = scmp.ne.s32.totalorder %s108, %s111
      %p120 = scmp.eq.s32.totalorder %s27, 1
      %p121 = por %p119, %p120
      %p122 = scmp.ne.s32.totalorder %s111, %s112
      %p123 = scmp.eq.s32.totalorder %s27, 0
      %p124 = por %p122, %p123
      %p125 = scmp.ne.s32.totalorder %s111, %s112
      %p126 = scmp.eq.s32.totalorder %s28, 1
      %p127 = por %p125, %p126
      %p129 = scmp.ne.s32.totalorder %s112, %s128
      %p130 = scmp.eq.s32.totalorder %s28, 0
      %p131 = por %p129, %p130
      %s132 = ssub.s32 %s29, %s41
      %p133 = scmp.eq.s32.totalorder %s132, 0
      %s135 = sadd.s32 %s134, 1
      %s136 = scalar_select %p133, %s134, %s135
      %p139 = pneg %p133
      %p140 = scmp.eq.s32.totalorder %s22, 1
      %p141 = por %p139, %p140
      %p142 = scmp.ne.s32.totalorder %s134, %s137
      %p143 = scmp.eq.s32.totalorder %s22, 0
      %p144 = por %p142, %p143
      %p145 = scmp.ne.s32.totalorder %s134, %s137
      %p146 = scmp.eq.s32.totalorder %s27, 1
      %p147 = por %p145, %p146
      %p148 = scmp.ne.s32.totalorder %s137, %s138
      %p149 = scmp.eq.s32.totalorder %s27, 0
      %p150 = por %p148, %p149
      %p151 = scmp.ne.s32.totalorder %s137, %s138
      %p152 = scmp.eq.s32.totalorder %s28, 1
      %p153 = por %p151, %p152
      %p155 = scmp.ne.s32.totalorder %s138, %s154
      %p156 = scmp.eq.s32.totalorder %s28, 0
      %p157 = por %p155, %p156
      %p158 = scmp.le.s32.totalorder 1, %s22
      %p159 = scmp.lt.s32.totalorder %s22, 3
      %p160 = pnand %p158, %p159
      %p161 = pneg %p160
      // Predicated region
      $region9: #{tpu_custom_call.1} parent=5 // pred_check
        _
      $region10: #{tpu_custom_call.1} parent=5 // pred_check_branch
        %163 = sbr.rel (%p160) target = $region12
      $region11: #{tpu_custom_call.1} parent=5 // pred_region
        %s164 = ssub.s32 %s22, 1
      $region12: #{tpu_custom_call.1} parent=5 // pred_fallthru
        _
      %p165 = scmp.lt.s32.totalorder %s22, 2
      // Predicated region
      $region13: #{tpu_custom_call.1} parent=5 // pred_check
        %p166 = pneg %p165
      $region14: #{tpu_custom_call.1} parent=5 // pred_check_branch
        %168 = sbr.rel (%p166) target = $region16
      $region15: #{tpu_custom_call.1} parent=5 // pred_region
        // Predicated region
        $region17: #{tpu_custom_call.1} parent=15 // pred_check
          %p169 = pneg %p60
        $region18: #{tpu_custom_call.1} parent=15 // pred_check_branch
          %171 = sbr.rel (%p169) target = $region20
        $region19: #{tpu_custom_call.1} parent=15 // pred_region
          %s172 = sand.u32 %s50, 1
          %s173 = scalar_lea.sflag [#allocation5], %s172
          %s174 = sand.u32 %s50, 1
          %s175 = smul.addr %s174, 16
          %s176 = scalar_lea.vmem [#allocation4], %s175
          %s177 = sadd.s32 %s29, %s30
          %p178 = scmp.lt.s32.totalorder %s177, 0
          %s179 = scalar_select %p178, %s177, 0
          %s180 = smul.u32 2, %s179
          %182 = vsyncadd %s173, 0
          %s183 = smul.addr %s180, 8
          %s184 = scalar_lea.hbm %s0, %s183
          %s185 = sshll.u32 %s184, 4
          %s186 = int_to_ptr.hbm [resolvable:$true] %s185
          %s187 = sshll.u32 %s176, 4
          %s188 = int_to_ptr.vmem [resolvable:$true] %s187
          %193 = dma.hbm_to_vmem [thread:$0]  %s186, 256, %s188, %s173, 128, 128, 8
        $region20: #{tpu_custom_call.1} parent=15 // pred_fallthru
          _
        // Predicated region
        $region21: #{tpu_custom_call.1} parent=15 // pred_check
          %p194 = pneg %p92
        $region22: #{tpu_custom_call.1} parent=15 // pred_check_branch
          %196 = sbr.rel (%p194) target = $region24
        $region23: #{tpu_custom_call.1} parent=15 // pred_region
          %s197 = sand.u32 %s82, 1
          %s198 = scalar_lea.sflag [#allocation8], %s197
          %s199 = sand.u32 %s82, 1
          %s200 = smul.addr %s199, 16
          %s201 = scalar_lea.vmem [#allocation7], %s200
          %s202 = sadd.s32 %s29, %s30
          %p203 = scmp.lt.s32.totalorder %s202, 0
          %s204 = scalar_select %p203, %s202, 0
          %s205 = smul.u32 2, %s204
          %207 = vsyncadd %s198, 0
          %s208 = smul.addr %s205, 8
          %s209 = scalar_lea.hbm %s1, %s208
          %s210 = sshll.u32 %s209, 4
          %s211 = int_to_ptr.hbm [resolvable:$true] %s210
          %s212 = sshll.u32 %s201, 4
          %s213 = int_to_ptr.vmem [resolvable:$true] %s212
          %218 = dma.hbm_to_vmem [thread:$0]  %s211, 256, %s213, %s198, 128, 128, 8
        $region24: #{tpu_custom_call.1} parent=15 // pred_fallthru
          _
      $region16: #{tpu_custom_call.1} parent=5 // pred_fallthru
        _
      %p219 = scmp.le.s32.totalorder 1, %s22
      %p220 = scmp.lt.s32.totalorder %s22, 3
      %p221 = pnand %p219, %p220
      %p222 = pneg %p221
      // Predicated region
      $region25: #{tpu_custom_call.1} parent=5 // pred_check
        _
      $region26: #{tpu_custom_call.1} parent=5 // pred_check_branch
        %224 = sbr.rel (%p221) target = $region28
      $region27: #{tpu_custom_call.1} parent=5 // pred_region
        %s225 = ssub.s32 %s22, 1
        %s226 = sand.u32 %s53, 1
        %s227 = scalar_lea.sflag [#allocation5], %s226
        %s228 = sand.u32 %s53, 1
        %s229 = smul.addr %s228, 16
        %s230 = scalar_lea.vmem [#allocation4], %s229
        // Predicated region
        $region29: #{tpu_custom_call.1} parent=27 // pred_check
          %p231 = pneg %p66
        $region30: #{tpu_custom_call.1} parent=27 // pred_check_branch
          %233 = sbr.rel (%p231) target = $region32
        $region31: #{tpu_custom_call.1} parent=27 // pred_region
          %235 = dma.done %s227, 256
        $region32: #{tpu_custom_call.1} parent=27 // pred_fallthru
          _
        %s236 = sand.u32 %s85, 1
        %s237 = scalar_lea.sflag [#allocation8], %s236
        %s238 = sand.u32 %s85, 1
        %s239 = smul.addr %s238, 16
        %s240 = scalar_lea.vmem [#allocation7], %s239
        // Predicated region
        $region33: #{tpu_custom_call.1} parent=27 // pred_check
          %p241 = pneg %p98
        $region34: #{tpu_custom_call.1} parent=27 // pred_check_branch
          %243 = sbr.rel (%p241) target = $region36
        $region35: #{tpu_custom_call.1} parent=27 // pred_region
          %245 = dma.done %s237, 256
        $region36: #{tpu_custom_call.1} parent=27 // pred_fallthru
          _
        %s246 = sand.u32 %s53, 1
        %s247 = scalar_lea.sflag [#allocation5], %s246
        %s248 = sand.u32 %s53, 1
        %s249 = smul.addr %s248, 16
        %s250 = scalar_lea.vmem [#allocation4], %s249
        %p251 = pneg %p66
        %p252 = pneg %p63
        %s253 = sand.u32 %s85, 1
        %s254 = scalar_lea.sflag [#allocation8], %s253
        %s255 = sand.u32 %s85, 1
        %s256 = smul.addr %s255, 16
        %s257 = scalar_lea.vmem [#allocation7], %s256
        %p258 = pneg %p98
        %p259 = pneg %p95
        %p260 = pneg %p124
        %p261 = pneg %p121
        %s262 = sand.u32 %s111, 1
        %s263 = scalar_lea.sflag [#allocation6], %s262
        %s264 = sand.u32 %s111, 1
        %s265 = smul.addr %s264, 8
        %s266 = scalar_lea.vmem [#allocation9], %s265
        %p267 = pneg %p150
        %p268 = pneg %p147
        %s269 = sand.u32 %s137, 1
        %s270 = scalar_lea.sflag [#allocation11], %s269
        %s271 = sand.u32 %s137, 1
        %s272 = smul.addr %s271, 8
        %s273 = scalar_lea.vmem [#allocation10], %s272
        %s274 = sadd.s32 %s31, %s32
        %p275 = scmp.lt.s32.totalorder %s274, 0
        %s276 = scalar_select %p275, %s274, 0
        %s277 = smul.u32 2, %s276
        %s278 = sadd.s32 %s31, %s32
        %p279 = scmp.lt.s32.totalorder %s278, 0
        %s280 = scalar_select %p279, %s278, 0
        %s281 = smul.u32 2, %s280
        %p282 = scmp.eq.s32.totalorder %s32, 0
        // Predicated region
        $region37: #{tpu_custom_call.1} parent=27 // pred_check
          %p283 = pneg %p282
        $region38: #{tpu_custom_call.1} parent=27 // pred_check_branch
          %285 = sbr.rel (%p283) target = $region40
        $region39: #{tpu_custom_call.1} parent=27 // pred_region
          %286 = vst [vmem:[#allocation2] sm:$0xff] 0.0
          %287 = vst [vmem:[#allocation3] sm:$0xff] 0.0
        $region40: #{tpu_custom_call.1} parent=27 // pred_fallthru
          _
        %v288 = vld [vmem:[%s230] sm:$0xff]
        %v289 = vld [vmem:[%s230 + $0x8] sm:$0xff]
        %v290 = vld [vmem:[%s240] sm:$0xff]
        %v291 = vld [vmem:[%s240 + $0x8] sm:$0xff]
        %v292 = vsub.f32 %v288, %v290
        %v293 = vsub.f32 %v289, %v291
        %s294 = sadd.s32 %s31, %s32
        %s295 = smul.u32 %s294, 16
        %s296 = sadd.s32 %s295, 16
        %p297 = scmp.le.s32.totalorder %s296, 16
        // Predicated region
        $region41: #{tpu_custom_call.1} parent=27 // pred_check
          %p298 = pneg %p297
        $region42: #{tpu_custom_call.1} parent=27 // pred_check_branch
          %300 = sbr.rel (%p298) target = $region44
        $region43: #{tpu_custom_call.1} parent=27 // pred_region
          %v301 = vand.u32 2147483647, %v292
          %v302 = vand.u32 2147483647, %v293
          %v303 = vld [vmem:[#allocation3] sm:$0xff]
          %v304 = vadd.f32 %v301, %v302
          %v305 = vadd.f32 %v303, %v304
          %306 = vst [vmem:[#allocation3] sm:$0xff] %v305
          %v307 = vld [vmem:[#allocation2] sm:$0xff]
          %v308 = vmul.f32 %v301, %v301
          %v309 = vmul.f32 %v302, %v302
          %v310 = vadd.f32 %v308, %v309
          %v311 = vadd.f32 %v307, %v310
          %312 = vst [vmem:[#allocation2] sm:$0xff] %v311
        $region44: #{tpu_custom_call.1} parent=27 // pred_fallthru
          _
        %p313 = scmp.gt.s32.totalorder %s296, 16
        // Predicated region
        $region45: #{tpu_custom_call.1} parent=27 // pred_check
          %p314 = pneg %p313
        $region46: #{tpu_custom_call.1} parent=27 // pred_check_branch
          %316 = sbr.rel (%p314) target = $region48
        $region47: #{tpu_custom_call.1} parent=27 // pred_region
          %v317 = vlaneseq
          %v318 = vshrl.u32 %v317, 7
          %v319 = vadd.s32 %v318, 8
          %s320 = ssub.s32 16, %s295
          %v321 = vstv %s320
          %vm322 = vcmp.lt.s32.totalorder %v318, %v321
          %vm323 = vcmp.lt.s32.totalorder %v319, %v321
          %v324 = vsel %vm322, %v292, 0.0
          %v325 = vsel %vm323, %v293, 0.0
          %v326 = vand.u32 2147483647, %v324
          %v327 = vand.u32 2147483647, %v325
          %v328 = vld [vmem:[#allocation3] sm:$0xff]
          %v329 = vadd.f32 %v326, %v327
          %v330 = vadd.f32 %v328, %v329
          %331 = vst [vmem:[#allocation3] sm:$0xff] %v330
          %v332 = vld [vmem:[#allocation2] sm:$0xff]
          %v333 = vmul.f32 %v326, %v326
          %v334 = vmul.f32 %v327, %v327
          %v335 = vadd.f32 %v333, %v334
          %v336 = vadd.f32 %v332, %v335
          %337 = vst [vmem:[#allocation2] sm:$0xff] %v336
        $region48: #{tpu_custom_call.1} parent=27 // pred_fallthru
          _
        // Predicated region
        $region49: #{tpu_custom_call.1} parent=27 // pred_check
          %p338 = pneg %p282
        $region50: #{tpu_custom_call.1} parent=27 // pred_check_branch
          %340 = sbr.rel (%p338) target = $region52
        $region51: #{tpu_custom_call.1} parent=27 // pred_region
          %v341 = vld [vmem:[#allocation2] sm:$0xff]
          %342 = vst [vmem:[%s266] sm:$0xff] %v341
          %v343 = vld [vmem:[#allocation3] sm:$0xff]
          %344 = vst [vmem:[%s273] sm:$0xff] %v343
        $region52: #{tpu_custom_call.1} parent=27 // pred_fallthru
          _
        %s345 = sand.u32 %s111, 1
        %s346 = scalar_lea.sflag [#allocation6], %s345
        %s347 = sand.u32 %s111, 1
        %s348 = smul.addr %s347, 8
        %s349 = scalar_lea.vmem [#allocation9], %s348
        %s350 = sand.u32 %s137, 1
        %s351 = scalar_lea.sflag [#allocation11], %s350
        %s352 = sand.u32 %s137, 1
        %s353 = smul.addr %s352, 8
        %s354 = scalar_lea.vmem [#allocation10], %s353
        // Predicated region
        $region53: #{tpu_custom_call.1} parent=27 // pred_check
          %p355 = pneg %p121
        $region54: #{tpu_custom_call.1} parent=27 // pred_check_branch
          %357 = sbr.rel (%p355) target = $region56
        $region55: #{tpu_custom_call.1} parent=27 // pred_region
          %359 = vsyncadd %s346, 0
          %s360 = smul.addr %s31, 8
          %s361 = scalar_lea.hbm %s2, %s360
          %s363 = sshll.u32 %s349, 4
          %s364 = int_to_ptr.vmem [resolvable:$true] %s363
          %s365 = sshll.u32 %s361, 4
          %s366 = int_to_ptr.hbm [resolvable:$true] %s365
          %368 = dma.vmem_to_hbm [thread:$0]  %s364, 128, %s366, %s346
        $region56: #{tpu_custom_call.1} parent=27 // pred_fallthru
          _
        // Predicated region
        $region57: #{tpu_custom_call.1} parent=27 // pred_check
          %p369 = pneg %p147
        $region58: #{tpu_custom_call.1} parent=27 // pred_check_branch
          %371 = sbr.rel (%p369) target = $region60
        $region59: #{tpu_custom_call.1} parent=27 // pred_region
          %373 = vsyncadd %s351, 0
          %s374 = smul.addr %s31, 8
          %s375 = scalar_lea.hbm %s3, %s374
          %s377 = sshll.u32 %s354, 4
          %s378 = int_to_ptr.vmem [resolvable:$true] %s377
          %s379 = sshll.u32 %s375, 4
          %s380 = int_to_ptr.hbm [resolvable:$true] %s379
          %382 = dma.vmem_to_hbm [thread:$0]  %s378, 128, %s380, %s351
        $region60: #{tpu_custom_call.1} parent=27 // pred_fallthru
          _
      $region28: #{tpu_custom_call.1} parent=5 // pred_fallthru
        _
      %p383 = scmp.le.s32.totalorder 2, %s22
      // Predicated region
      $region61: #{tpu_custom_call.1} parent=5 // pred_check
        %p384 = pneg %p383
      $region62: #{tpu_custom_call.1} parent=5 // pred_check_branch
        %386 = sbr.rel (%p384) target = $region64
      $region63: #{tpu_custom_call.1} parent=5 // pred_region
        %s387 = ssub.s32 %s22, 2
        // Predicated region
        $region65: #{tpu_custom_call.1} parent=63 // pred_check
          %p388 = pneg %p127
        $region66: #{tpu_custom_call.1} parent=63 // pred_check_branch
          %390 = sbr.rel (%p388) target = $region68
        $region67: #{tpu_custom_call.1} parent=63 // pred_region
          %s391 = sand.u32 %s112, 1
          %s392 = scalar_lea.sflag [#allocation6], %s391
          %s393 = sand.u32 %s112, 1
          %s394 = smul.addr %s393, 8
          %s395 = scalar_lea.vmem [#allocation9], %s394
          %397 = dma.done %s392, 128
        $region68: #{tpu_custom_call.1} parent=63 // pred_fallthru
          _
        // Predicated region
        $region69: #{tpu_custom_call.1} parent=63 // pred_check
          %p398 = pneg %p153
        $region70: #{tpu_custom_call.1} parent=63 // pred_check_branch
          %400 = sbr.rel (%p398) target = $region72
        $region71: #{tpu_custom_call.1} parent=63 // pred_region
          %s401 = sand.u32 %s138, 1
          %s402 = scalar_lea.sflag [#allocation11], %s401
          %s403 = sand.u32 %s138, 1
          %s404 = smul.addr %s403, 8
          %s405 = scalar_lea.vmem [#allocation10], %s404
          %407 = dma.done %s402, 128
        $region72: #{tpu_custom_call.1} parent=63 // pred_fallthru
          _
      $region64: #{tpu_custom_call.1} parent=5 // pred_fallthru
        _
    $region6: #{tpu_custom_call.1} parent=1 // loop_footer
      %s26 = sadd.s32 1, %s22
    $region7: #{tpu_custom_call.1} parent=1 // loop_footer_branch
      %21 = sbr.rel target = $region3
    $region8: #{tpu_custom_call.1} parent=1 // loop_exit
      _
    %408 = vsyncpa [#allocation5], 1
    %s409 = scalar_lea.sflag [#allocation5], 1
    %410 = vsyncpa %s409, 1
    %411 = vsyncpa [#allocation8], 1
    %s412 = scalar_lea.sflag [#allocation8], 1
    %413 = vsyncpa %s412, 1
    %414 = vsyncpa [#allocation6], 1
    %s415 = scalar_lea.sflag [#allocation6], 1
    %416 = vsyncpa %s415, 1
    %417 = vsyncpa [#allocation11], 1
    %s418 = scalar_lea.sflag [#allocation11], 1
    %419 = vsyncpa %s418, 1

</llo_original>
